<compile_context>
chip_gen: v5e
topology: v5e:2x2
jax: 0.10.0
libtpu: 0.0.40
codegen_flags: <defaults>
</compile_context>

<pallas_src>
import functools

import jax
import jax.numpy as jnp
from jax import lax
from jax.experimental import pallas as pl
from jax.experimental.pallas import tpu as pltpu


def _round_up(x, m):
    return (x + m - 1) // m * m


def _ohiou_partial_kernel(logits_ref, labels_ref, out_ref, *, hw, mask_tail):
    # logits_ref: (C, T)   float   -- classes on sublanes, pixels lane-dense
    # labels_ref: (1, T)   int     -- widened to int32 below
    # out_ref:    (8, 128) float32 -- per-grid-step partial sum (lane-dense)
    x = logits_ref[...].astype(jnp.float32)              # (C, T)
    lbl = labels_ref[...].astype(jnp.int32)              # (1, T)
    C, T = x.shape

    # Numerically-stable softmax pieces over the class (sublane) axis.
    m = jnp.max(x, axis=0, keepdims=True)                # (1, T)
    e = jnp.exp(x - m)                                   # (C, T)
    denom = jnp.sum(e, axis=0, keepdims=True)            # (1, T)

    # Gather-before-normalize: pick exp(x) at the label class (ignored labels
    # and any label >= C match nothing -> 0, reproducing one_hot(...)[:, :C]),
    # then normalize only the (1, T) row.  Exact reciprocal (division).
    cls = lax.broadcasted_iota(jnp.int32, (C, 1), 0)      # (C, 1), broadcasts
    e_lbl = jnp.sum(jnp.where(lbl == cls, e, 0.0), axis=0, keepdims=True)
    p = e_lbl / denom                                     # (1, T)

    if mask_tail:
        # Edge block: lanes past HW contain stale VMEM garbage (inputs are NOT
        # padded in HBM).  Mask AFTER the divide so garbage-driven NaN/Inf in
        # denom/e_lbl is dropped (where with a false predicate selects 0.0).
        j = pl.program_id(1)
        pos = j * T + lax.broadcasted_iota(jnp.int32, (1, T), 1)
        p = jnp.where(pos < hw, p, 0.0)

    s = jnp.sum(p)                                        # scalar partial sum
    out_ref[...] = jnp.full((8, 128), s, dtype=jnp.float32)


def ohiou_loss(logits, labels, n_classes, ignore_lb=255, block_pixels=None):
    """OHIoULoss.forward.  logits: (N,C,H,W) float; labels: (N,H,W) int -> scalar."""
    N, C, H, W = logits.shape
    assert C == n_classes
    # Closed-form reduction silently counts ignored pixels if ignore_lb < C.
    assert ignore_lb >= n_classes, "ignore_lb must be >= n_classes"
    HW = H * W

    # NCHW consumed directly: free reshape keeps pixels on the lane (last) axis.
    x = logits.reshape(N, C, HW)
    if not jnp.issubdtype(labels.dtype, jnp.integer):
        labels = labels.astype(jnp.int32)
    y = labels.reshape(N, 1, HW)   # kept in HBM dtype; widened in-kernel

    # Pixel tile: lane-dense multiple of 128, logits block capped ~2 MiB
    # (safe on v5e default scoped VMEM, sweet spot for v7x, ~85%+ roofline v6e).
    if block_pixels is None:
        bytes_per_pixel = C * jnp.dtype(logits.dtype).itemsize
        cap = max(128, ((2 * 1024 * 1024) // bytes_per_pixel) // 128 * 128)
        t = min(cap, _round_up(HW, 128))
    else:
        t = block_pixels
    assert t % 128 == 0
    n_j = pl.cdiv(HW, t)
    mask_tail = (HW % t) != 0   # static: edge block needs the tail mask

    kernel = functools.partial(_ohiou_partial_kernel, hw=HW, mask_tail=mask_tail)

    partials = pl.pallas_call(
        kernel,
        out_shape=jax.ShapeDtypeStruct((N, n_j, 8, 128), jnp.float32),
        grid_spec=pltpu.PrefetchScalarGridSpec(
            num_scalar_prefetch=0,
            grid=(N, n_j),
            in_specs=[
                pl.BlockSpec((None, C, t), lambda n, j: (n, 0, j)),
                pl.BlockSpec((None, 1, t), lambda n, j: (n, 0, j)),
            ],
            out_specs=pl.BlockSpec((None, None, 8, 128),
                                   lambda n, j: (n, j, 0, 0)),
        ),
        compiler_params=pltpu.CompilerParams(
            dimension_semantics=("parallel", "parallel"),
            vmem_limit_bytes=48 * 1024 * 1024,
        ),
    )(x, y)

    # Sum of true-class probabilities over all valid pixels.
    # TODO(synk): for multi-megapixel batches, do this final sum/subtract in
    # f64 (or compensated) -- requires jax_enable_x64, left in f32 here.
    s = jnp.sum(partials[:, :, 0, 0])

    # Closed-form IoU reduction (see header):
    #   true==1 -> iou = p / ((p + 1 - p) + 1e-7) = p / (1 + 1e-7);  true==0 -> 0
    iou_sum = s / (1.0 + 1e-07)
    total = float(N * C * H * W)
    return (total - iou_sum) / float(C * H * W)
    # Note: n_min / thresh from the module constructor are unused by forward().


def _reference(logits, labels, n_classes, ignore_lb=255):
    """Pure-JAX mirror of the PyTorch forward."""
    probs = jax.nn.softmax(logits, axis=1)                               # (N,C,H,W)
    lbl = jnp.where(labels == ignore_lb, n_classes, labels)
    true = jax.nn.one_hot(lbl, n_classes + 1, axis=1)[:, :n_classes]     # (N,C,H,W)
    inter = true * probs
    cardinality = probs + true
    union = cardinality - inter
    iou = inter / (union + 1e-07)
    loss = jnp.sum(1.0 - iou, axis=0)                                    # (C,H,W)
    return jnp.mean(loss)


if __name__ == "__main__":
    key = jax.random.PRNGKey(0)
    k1, k2, k3 = jax.random.split(key, 3)

    # W=17 makes HW=272 non-tile-aligned, exercising the unpadded tail path.
    N, C, H, W = 2, 4, 16, 17
    logits = jax.random.normal(k1, (N, C, H, W), dtype=jnp.float32)
    labels = jax.random.randint(k2, (N, H, W), 0, C, dtype=jnp.int32)
    # sprinkle in some ignore labels
    ignore_mask = jax.random.uniform(k3, (N, H, W)) < 0.1
    labels = jnp.where(ignore_mask, 255, labels)

    ref = _reference(logits, labels, n_classes=C, ignore_lb=255)

    # Default block size: single partial block per batch element (tail mask).
    loss = ohiou_loss(logits, labels, n_classes=C, ignore_lb=255)
    loss = jax.block_until_ready(loss)
    assert jnp.allclose(loss, ref, atol=1e-4, rtol=1e-4), (loss, ref)

    # Small block size: multi-block grid + partial edge block.
    loss2 = ohiou_loss(logits, labels, n_classes=C, ignore_lb=255,
                       block_pixels=128)
    loss2 = jax.block_until_ready(loss2)
    assert jnp.allclose(loss2, ref, atol=1e-4, rtol=1e-4), (loss2, ref)

    print("KERNEL_OK")
</pallas_src>

<mosaic_0001>
module attributes {stable_mosaic.version = 11 : i64} {
  func.func @_ohiou_partial_kernel(%arg0: i32, %arg1: i32, %arg2: memref<1x4x384xf32, #tpu.memory_space<vmem>>, %arg3: memref<1x1x384xi32, #tpu.memory_space<vmem>>, %arg4: memref<1x1x8x128xf32, #tpu.memory_space<vmem>>) attributes {dimension_semantics = [#tpu.dimension_semantics<parallel>, #tpu.dimension_semantics<parallel>], iteration_bounds = array<i64: 2, 1>, scalar_prefetch = 0 : i64, scratch_operands = 0 : i64, tpu.core_type = #tpu.core_type<tc>, window_params = [{transform_indices = @transform_0, window_bounds = array<i64: 1, 4, 384>}, {transform_indices = @transform_1, window_bounds = array<i64: 1, 1, 384>}, {transform_indices = @transform_2, window_bounds = array<i64: 1, 1, 8, 128>}]} {
    %c0 = arith.constant 0 : index
    %c0_0 = arith.constant 0 : index
    %c0_1 = arith.constant 0 : index
    %0 = vector.load %arg2[%c0, %c0_0, %c0_1] : memref<1x4x384xf32, #tpu.memory_space<vmem>>, vector<1x4x384xf32>
    %1 = vector.shape_cast %0 : vector<1x4x384xf32> to vector<4x384xf32>
    %c0_2 = arith.constant 0 : index
    %c0_3 = arith.constant 0 : index
    %c0_4 = arith.constant 0 : index
    %2 = vector.load %arg3[%c0_2, %c0_3, %c0_4] : memref<1x1x384xi32, #tpu.memory_space<vmem>>, vector<1x1x384xi32>
    %3 = vector.shape_cast %2 : vector<1x1x384xi32> to vector<1x384xi32>
    %cst = arith.constant dense<0xFF800000> : vector<384xf32>
    %4 = vector.multi_reduction <maximumf>, %1, %cst [0] : vector<4x384xf32> to vector<384xf32>
    %5 = vector.shape_cast %4 : vector<384xf32> to vector<1x384xf32>
    %6 = vector.broadcast %5 : vector<1x384xf32> to vector<4x384xf32>
    %7 = arith.subf %1, %6 : vector<4x384xf32>
    %8 = math.exp %7 : vector<4x384xf32>
    %cst_5 = arith.constant dense<0.000000e+00> : vector<384xf32>
    %9 = vector.multi_reduction <add>, %8, %cst_5 [0] : vector<4x384xf32> to vector<384xf32>
    %10 = vector.shape_cast %9 : vector<384xf32> to vector<1x384xf32>
    %11 = tpu.iota {dimensions = array<i32: 0>} : vector<4x1xi32>
    %12 = vector.broadcast %3 : vector<1x384xi32> to vector<4x384xi32>
    %13 = vector.broadcast %11 : vector<4x1xi32> to vector<4x384xi32>
    %14 = arith.cmpi eq, %12, %13 : vector<4x384xi32>
    %cst_6 = arith.constant 0.000000e+00 : f32
    %15 = vector.broadcast %cst_6 : f32 to vector<4x384xf32>
    %16 = arith.select %14, %8, %15 : vector<4x384xi1>, vector<4x384xf32>
    %cst_7 = arith.constant dense<0.000000e+00> : vector<384xf32>
    %17 = vector.multi_reduction <add>, %16, %cst_7 [0] : vector<4x384xf32> to vector<384xf32>
    %18 = vector.shape_cast %17 : vector<384xf32> to vector<1x384xf32>
    %19 = arith.divf %18, %10 : vector<1x384xf32>
    %c384_i32 = arith.constant 384 : i32
    %20 = arith.muli %arg1, %c384_i32 : i32
    %21 = tpu.iota {dimensions = array<i32: 1>} : vector<1x384xi32>
    %22 = vector.broadcast %20 : i32 to vector<1x384xi32>
    %23 = arith.addi %22, %21 : vector<1x384xi32>
    %c272_i32 = arith.constant 272 : i32
    %24 = vector.broadcast %c272_i32 : i32 to vector<1x384xi32>
    %25 = arith.cmpi slt, %23, %24 : vector<1x384xi32>
    %cst_8 = arith.constant 0.000000e+00 : f32
    %26 = vector.broadcast %cst_8 : f32 to vector<1x384xf32>
    %27 = arith.select %25, %19, %26 : vector<1x384xi1>, vector<1x384xf32>
    %28 = vector.shape_cast %27 : vector<1x384xf32> to vector<1x1x384xf32>
    %cst_9 = arith.constant dense<0.000000e+00> : vector<1xf32>
    %29 = vector.multi_reduction <add>, %28, %cst_9 [1, 2] : vector<1x1x384xf32> to vector<1xf32>
    %30 = vector.shape_cast %29 : vector<1xf32> to vector<1x1x1xf32>
    %31 = vector.extract %30[0, 0, 0] : f32 from vector<1x1x1xf32>
    %32 = vector.broadcast %31 : f32 to vector<8x128xf32>
    %c0_10 = arith.constant 0 : index
    %c0_11 = arith.constant 0 : index
    %c0_12 = arith.constant 0 : index
    %c0_13 = arith.constant 0 : index
    %33 = vector.load %arg4[%c0_10, %c0_11, %c0_12, %c0_13] : memref<1x1x8x128xf32, #tpu.memory_space<vmem>>, vector<1x1x8x128xf32>
    %34 = vector.shape_cast %33 : vector<1x1x8x128xf32> to vector<8x128xf32>
    %35 = vector.shape_cast %32 : vector<8x128xf32> to vector<1x1x8x128xf32>
    tpu.vector_store %arg4[%c0_10, %c0_11, %c0_12, %c0_13], %35 {strides = array<i32>} : memref<1x1x8x128xf32, #tpu.memory_space<vmem>>, vector<1x1x8x128xf32>,
    return
  }
  func.func @transform_0(%arg0: i32, %arg1: i32) -> (i32, i32, i32) {
    %c0_i32 = arith.constant 0 : i32
    %c0_i32_0 = arith.constant 0 : i32
    return %arg0, %c0_i32, %arg1 : i32, i32, i32
  }
  func.func @transform_1(%arg0: i32, %arg1: i32) -> (i32, i32, i32) {
    %c0_i32 = arith.constant 0 : i32
    %c0_i32_0 = arith.constant 0 : i32
    return %arg0, %c0_i32, %arg1 : i32, i32, i32
  }
  func.func @transform_2(%arg0: i32, %arg1: i32) -> (i32, i32, i32, i32) {
    %c0_i32 = arith.constant 0 : i32
    %c0_i32_0 = arith.constant 0 : i32
    %c0_i32_1 = arith.constant 0 : i32
    return %arg0, %arg1, %c0_i32, %c0_i32_0 : i32, i32, i32, i32
  }
}

</mosaic_0001>

<llo_original>
// kernel: tpu_custom_call.1
$region0: #{tpu_custom_call.1}
  #allocation0 [shape = 'u32[]', space=smem, size = 0x4, offset = 0x4, fixed_abs, tag = 'smem constant byte address 0x4 - core index']
  #allocation1 [shape = 'u32[72,128]{1,0:T(1,128)}', space=vmem, size = 0x9000, scoped, tag = 'internal scratch']
  %s0 = inlined_call_operand.hbm [shape: f32[2,4,272], index: 0, kind: input, shape index: {}]
  %s1 = inlined_call_operand.hbm [shape: s32[2,1,272], index: 1, kind: input, shape index: {}]
  %s2 = inlined_call_operand.hbm [shape: f32[2,1,8,128], index: 2, kind: output, shape index: {}]
  %s3 = sld [smem:[#allocation0]]
  $region49: #{tpu_custom_call.1} parent=0
    _
  %s5 = ssub.s32 1, %s3
  %s6 = scalar_select 0, %s5, %s3
  $region1: #{tpu_custom_call.1} parent=0
    #allocation2 [shape = 'u8[12288]{0}', space=vmem, size = 0x3000, scoped, tag = 'input window, operand 0']
    #allocation3 [shape = 's32[2]{0}', space=sflag, size = 0x8, scoped, tag = 'scoped memory for tpu_custom_call.1']
    #allocation4 [shape = 's32[2]{0}', space=sflag, size = 0x8, scoped, tag = 'scoped memory for tpu_custom_call.1']
    #allocation5 [shape = 'u8[3072]{0}', space=vmem, size = 0xc00, scoped, tag = 'input window, operand 1']
    #allocation6 [shape = 's32[2]{0}', space=sflag, size = 0x8, scoped, tag = 'scoped memory for tpu_custom_call.1']
    #allocation7 [shape = 'u8[8192]{0}', space=vmem, size = 0x2000, scoped, tag = 'output window, operand 0']
    %7 = vsyncpa [#allocation3], 0
    %s8 = scalar_lea.sflag [#allocation3], 1
    %9 = vsyncpa %s8, 0
    %10 = vsyncpa [#allocation6], 0
    %s11 = scalar_lea.sflag [#allocation6], 1
    %12 = vsyncpa %s11, 0
    %13 = vsyncpa [#allocation4], 0
    %s14 = scalar_lea.sflag [#allocation4], 1
    %15 = vsyncpa %s14, 0
    loop: start=0, step=1, limit=4
    $region2: #{tpu_custom_call.1} parent=1 // loop_pre_header
      _
    $region3: #{tpu_custom_call.1} parent=1 // loop_header
      %s17 = sphi 0, %s21
      %p18 = scmp.ge.s32.totalorder %s17, 4
      %s24 = sphi 0, %s36
      %s25 = sphi 0, %s32
      %s26 = sphi 0, %s24
      %s27 = sphi 0, %s25
      %s28 = sphi 0, %s26
      %s29 = sphi 0, %s27
      %s41 = sphi 0, %s43
      %s44 = sphi 0, %s41
      %s45 = sphi 0, %s44
      %s61 = sphi 0, %s45
      %s69 = sphi 0, %s71
      %s72 = sphi 0, %s69
      %s73 = sphi 0, %s72
      %s89 = sphi 0, %s73
      %s97 = sphi 0, %s99
      %s100 = sphi 0, %s97
      %s101 = sphi 0, %s100
      %s117 = sphi 0, %s101
    $region4: #{tpu_custom_call.1} parent=1 // loop_header_branch
      %20 = sbr.rel (%p18) target = $region8
    $region5: #{tpu_custom_call.1} parent=1 // loop_body
      %s22 = ssub.s32 %s17, 1
      %s23 = ssub.s32 %s17, 2
      %s30 = sadd.s32 1, %s25
      %p31 = scmp.ge.s32.totalorder %s30, 1
      %s32 = scalar_select %p31, 0, %s30
      %s33 = sadd.s32 1, %s24
      %s34 = scalar_select %p31, %s33, %s24
      %p35 = scmp.ge.s32.totalorder %s34, 2
      %s36 = scalar_select %p35, 0, %s34
      %s37 = ssub.s32 %s24, %s36
      %s38 = ssub.s32 %s25, %s32
      %s39 = sor.u32 %s37, %s38
      %p40 = scmp.eq.s32.totalorder %s39, 0
      %s42 = sadd.s32 %s41, 1
      %s43 = scalar_select %p40, %s41, %s42
      %p46 = pneg %p40
      %p47 = scmp.eq.s32.totalorder %s17, 1
      %p48 = por %p46, %p47
      %p49 = scmp.ne.s32.totalorder %s41, %s44
      %p50 = scmp.eq.s32.totalorder %s17, 0
      %p51 = por %p49, %p50
      %p52 = scmp.ne.s32.totalorder %s41, %s44
      %p53 = scmp.eq.s32.totalorder %s22, 1
      %p54 = por %p52, %p53
      %p55 = scmp.ne.s32.totalorder %s44, %s45
      %p56 = scmp.eq.s32.totalorder %s22, 0
      %p57 = por %p55, %p56
      %p58 = scmp.ne.s32.totalorder %s44, %s45
      %p59 = scmp.eq.s32.totalorder %s23, 1
      %p60 = por %p58, %p59
      %p62 = scmp.ne.s32.totalorder %s45, %s61
      %p63 = scmp.eq.s32.totalorder %s23, 0
      %p64 = por %p62, %p63
      %s65 = ssub.s32 %s24, %s36
      %s66 = ssub.s32 %s25, %s32
      %s67 = sor.u32 %s65, %s66
      %p68 = scmp.eq.s32.totalorder %s67, 0
      %s70 = sadd.s32 %s69, 1
      %s71 = scalar_select %p68, %s69, %s70
      %p74 = pneg %p68
      %p75 = scmp.eq.s32.totalorder %s17, 1
      %p76 = por %p74, %p75
      %p77 = scmp.ne.s32.totalorder %s69, %s72
      %p78 = scmp.eq.s32.totalorder %s17, 0
      %p79 = por %p77, %p78
      %p80 = scmp.ne.s32.totalorder %s69, %s72
      %p81 = scmp.eq.s32.totalorder %s22, 1
      %p82 = por %p80, %p81
      %p83 = scmp.ne.s32.totalorder %s72, %s73
      %p84 = scmp.eq.s32.totalorder %s22, 0
      %p85 = por %p83, %p84
      %p86 = scmp.ne.s32.totalorder %s72, %s73
      %p87 = scmp.eq.s32.totalorder %s23, 1
      %p88 = por %p86, %p87
      %p90 = scmp.ne.s32.totalorder %s73, %s89
      %p91 = scmp.eq.s32.totalorder %s23, 0
      %p92 = por %p90, %p91
      %s93 = ssub.s32 %s24, %s36
      %s94 = ssub.s32 %s25, %s32
      %s95 = sor.u32 %s93, %s94
      %p96 = scmp.eq.s32.totalorder %s95, 0
      %s98 = sadd.s32 %s97, 1
      %s99 = scalar_select %p96, %s97, %s98
      %p102 = pneg %p96
      %p103 = scmp.eq.s32.totalorder %s17, 1
      %p104 = por %p102, %p103
      %p105 = scmp.ne.s32.totalorder %s97, %s100
      %p106 = scmp.eq.s32.totalorder %s17, 0
      %p107 = por %p105, %p106
      %p108 = scmp.ne.s32.totalorder %s97, %s100
      %p109 = scmp.eq.s32.totalorder %s22, 1
      %p110 = por %p108, %p109
      %p111 = scmp.ne.s32.totalorder %s100, %s101
      %p112 = scmp.eq.s32.totalorder %s22, 0
      %p113 = por %p111, %p112
      %p114 = scmp.ne.s32.totalorder %s100, %s101
      %p115 = scmp.eq.s32.totalorder %s23, 1
      %p116 = por %p114, %p115
      %p118 = scmp.ne.s32.totalorder %s101, %s117
      %p119 = scmp.eq.s32.totalorder %s23, 0
      %p120 = por %p118, %p119
      %p121 = scmp.le.s32.totalorder 1, %s17
      %p122 = scmp.lt.s32.totalorder %s17, 3
      %p123 = pnand %p121, %p122
      %p124 = pneg %p123
      // Predicated region
      $region9: #{tpu_custom_call.1} parent=5 // pred_check
        _
      $region10: #{tpu_custom_call.1} parent=5 // pred_check_branch
        %126 = sbr.rel (%p123) target = $region12
      $region11: #{tpu_custom_call.1} parent=5 // pred_region
        %s127 = ssub.s32 %s17, 1
      $region12: #{tpu_custom_call.1} parent=5 // pred_fallthru
        _
      %p128 = scmp.lt.s32.totalorder %s17, 2
      // Predicated region
      $region13: #{tpu_custom_call.1} parent=5 // pred_check
        %p129 = pneg %p128
      $region14: #{tpu_custom_call.1} parent=5 // pred_check_branch
        %131 = sbr.rel (%p129) target = $region16
      $region15: #{tpu_custom_call.1} parent=5 // pred_region
        // Predicated region
        $region17: #{tpu_custom_call.1} parent=15 // pred_check
          %p132 = pneg %p51
        $region18: #{tpu_custom_call.1} parent=15 // pred_check_branch
          %134 = sbr.rel (%p132) target = $region20
        $region19: #{tpu_custom_call.1} parent=15 // pred_region
          %s135 = sand.u32 %s41, 1
          %s136 = scalar_lea.sflag [#allocation3], %s135
          %s137 = sand.u32 %s41, 1
          %s138 = smul.addr %s137, 12
          %s139 = scalar_lea.vmem [#allocation2], %s138
          %s140 = smul.u32 3, %s25
          %142 = vsyncadd %s136, 0
          %s143 = smul.addr %s24, 3
          %s144 = sadd.s32 %s140, %s143
          %s145 = smul.addr %s144, 4
          %s146 = scalar_lea.hbm %s0, %s145
          %s148 = sshll.u32 %s146, 4
          %s149 = int_to_ptr.hbm [resolvable:$true] %s148
          %s150 = sshll.u32 %s139, 4
          %s151 = int_to_ptr.vmem [resolvable:$true] %s150
          %153 = dma.hbm_to_vmem [thread:$0]  %s149, 192, %s151, %s136
        $region20: #{tpu_custom_call.1} parent=15 // pred_fallthru
          _
        // Predicated region
        $region21: #{tpu_custom_call.1} parent=15 // pred_check
          %p154 = pneg %p79
        $region22: #{tpu_custom_call.1} parent=15 // pred_check_branch
          %156 = sbr.rel (%p154) target = $region24
        $region23: #{tpu_custom_call.1} parent=15 // pred_region
          %s157 = sand.u32 %s69, 1
          %s158 = scalar_lea.sflag [#allocation6], %s157
          %s159 = sand.u32 %s69, 1
          %s160 = smul.addr %s159, 3
          %s161 = scalar_lea.vmem [#allocation5], %s160
          %s162 = smul.u32 3, %s25
          %164 = vsyncadd %s158, 0
          %s165 = smul.addr %s24, 3
          %s166 = sadd.s32 %s162, %s165
          %s167 = scalar_lea.hbm %s1, %s166
          %s169 = sshll.u32 %s167, 4
          %s170 = int_to_ptr.hbm [resolvable:$true] %s169
          %s171 = sshll.u32 %s161, 4
          %s172 = int_to_ptr.vmem [resolvable:$true] %s171
          %174 = dma.hbm_to_vmem [thread:$0]  %s170, 48, %s172, %s158
        $region24: #{tpu_custom_call.1} parent=15 // pred_fallthru
          _
      $region16: #{tpu_custom_call.1} parent=5 // pred_fallthru
        _
      %p175 = scmp.le.s32.totalorder 1, %s17
      %p176 = scmp.lt.s32.totalorder %s17, 3
      %p177 = pnand %p175, %p176
      %p178 = pneg %p177
      // Predicated region
      $region25: #{tpu_custom_call.1} parent=5 // pred_check
        _
      $region26: #{tpu_custom_call.1} parent=5 // pred_check_branch
        %180 = sbr.rel (%p177) target = $region28
      $region27: #{tpu_custom_call.1} parent=5 // pred_region
        %s181 = ssub.s32 %s17, 1
        %s182 = sand.u32 %s44, 1
        %s183 = scalar_lea.sflag [#allocation3], %s182
        %s184 = sand.u32 %s44, 1
        %s185 = smul.addr %s184, 12
        %s186 = scalar_lea.vmem [#allocation2], %s185
        // Predicated region
        $region29: #{tpu_custom_call.1} parent=27 // pred_check
          %p187 = pneg %p57
        $region30: #{tpu_custom_call.1} parent=27 // pred_check_branch
          %189 = sbr.rel (%p187) target = $region32
        $region31: #{tpu_custom_call.1} parent=27 // pred_region
          %191 = dma.done %s183, 192
        $region32: #{tpu_custom_call.1} parent=27 // pred_fallthru
          _
        %s192 = sand.u32 %s72, 1
        %s193 = scalar_lea.sflag [#allocation6], %s192
        %s194 = sand.u32 %s72, 1
        %s195 = smul.addr %s194, 3
        %s196 = scalar_lea.vmem [#allocation5], %s195
        // Predicated region
        $region33: #{tpu_custom_call.1} parent=27 // pred_check
          %p197 = pneg %p85
        $region34: #{tpu_custom_call.1} parent=27 // pred_check_branch
          %199 = sbr.rel (%p197) target = $region36
        $region35: #{tpu_custom_call.1} parent=27 // pred_region
          %201 = dma.done %s193, 48
        $region36: #{tpu_custom_call.1} parent=27 // pred_fallthru
          _
        %s202 = sand.u32 %s44, 1
        %s203 = scalar_lea.sflag [#allocation3], %s202
        %s204 = sand.u32 %s44, 1
        %s205 = smul.addr %s204, 12
        %s206 = scalar_lea.vmem [#allocation2], %s205
        %p207 = pneg %p57
        %p208 = pneg %p54
        %s209 = sand.u32 %s72, 1
        %s210 = scalar_lea.sflag [#allocation6], %s209
        %s211 = sand.u32 %s72, 1
        %s212 = smul.addr %s211, 3
        %s213 = scalar_lea.vmem [#allocation5], %s212
        %p214 = pneg %p85
        %p215 = pneg %p82
        %p216 = pneg %p113
        %p217 = pneg %p110
        %s218 = sand.u32 %s100, 1
        %s219 = scalar_lea.sflag [#allocation4], %s218
        %s220 = sand.u32 %s100, 1
        %s221 = smul.addr %s220, 8
        %s222 = scalar_lea.vmem [#allocation7], %s221
        %s223 = smul.u32 3, %s27
        %s224 = smul.u32 3, %s27
        %v225 = vld [vmem:[%s186] sm:$0xff]
        %v226 = vld [vmem:[%s186 + $0x8] sm:$0xf]
        %v227 = vld [vmem:[%s196] sm:$0x7]
        %230 = vst [vmem:[#allocation1] ss:$2 sm:$0xff] %v225
        %s231 = scalar_lea.vmem [#allocation1], 16
        %232 = vst [vmem:[%s231] ss:$2 sm:$0xff] %v226
        %v233 = vld.sshfl [vmem:[#allocation1] sm:$0xff pattern:$0x75316420]
        %v234 = vld.sshfl [vmem:[#allocation1 + $0x8] sm:$0xff pattern:$0x75316420]
        %v235 = vld.sshfl [vmem:[#allocation1 + $0x10] sm:$0xff pattern:$0x75316420]
        %vm239 = vcmask 1043456
        %v240 = vsel %vm239, %v233, -inf
        %v241 = vrot.slane %v240, 4
        %v242 = vmax.f32 %v240, %v241
        %v243 = vrot.slane %v242, 2
        %v244 = vmax.f32 %v242, %v243
        %v245 = vrot.slane %v244, 1
        %v246 = vmax.f32 %v244, %v245
        %v247 = vsel %vm239, %v234, -inf
        %v248 = vrot.slane %v247, 4
        %v249 = vmax.f32 %v247, %v248
        %v250 = vrot.slane %v249, 2
        %v251 = vmax.f32 %v249, %v250
        %v252 = vrot.slane %v251, 1
        %v253 = vmax.f32 %v251, %v252
        %v254 = vsel %vm239, %v235, -inf
        %v255 = vrot.slane %v254, 4
        %v256 = vmax.f32 %v254, %v255
        %v257 = vrot.slane %v256, 2
        %v258 = vmax.f32 %v256, %v257
        %v259 = vrot.slane %v258, 1
        %v260 = vmax.f32 %v258, %v259
        %v263 = vrot.slane %v253, 4
        %v264 = vsel %vm239, %v246, %v263
        %v266 = vsub.f32 %v225, %v264
        %v267 = vsub.f32 %v226, %v260
        %v268 = vmul.f32 %v266, 1.442695
        %v269 = vpow.pop %v268
        %v270 = vmul.f32 %v267, 1.442695
        %v271 = vpow.pop %v270
        %274 = vst [vmem:[#allocation1] ss:$2 sm:$0xff] %v269
        %s275 = scalar_lea.vmem [#allocation1], 16
        %276 = vst [vmem:[%s275] ss:$2 sm:$0xff] %v271
        %v277 = vld.sshfl [vmem:[#allocation1] sm:$0xff pattern:$0x75316420]
        %v278 = vld.sshfl [vmem:[#allocation1 + $0x8] sm:$0xff pattern:$0x75316420]
        %v279 = vld.sshfl [vmem:[#allocation1 + $0x10] sm:$0xff pattern:$0x75316420]
        %v283 = vsel %vm239, %v277, 0.0
        %v284 = vrot.slane %v283, 4
        %v285 = vadd.f32 %v283, %v284
        %v286 = vrot.slane %v285, 2
        %v287 = vadd.f32 %v285, %v286
        %v288 = vrot.slane %v287, 1
        %v289 = vadd.f32 %v287, %v288
        %v290 = vsel %vm239, %v278, 0.0
        %v291 = vrot.slane %v290, 4
        %v292 = vadd.f32 %v290, %v291
        %v293 = vrot.slane %v292, 2
        %v294 = vadd.f32 %v292, %v293
        %v295 = vrot.slane %v294, 1
        %v296 = vadd.f32 %v294, %v295
        %v297 = vsel %vm239, %v279, 0.0
        %v298 = vrot.slane %v297, 4
        %v299 = vadd.f32 %v297, %v298
        %v300 = vrot.slane %v299, 2
        %v301 = vadd.f32 %v299, %v300
        %v302 = vrot.slane %v301, 1
        %v303 = vadd.f32 %v301, %v302
        %v304 = vlaneseq
        %v305 = vshrl.u32 %v304, 7
        %v306 = vperm.slane %v227, 0
        %v307 = vperm.slane %v227, 1
        %v308 = vperm.slane %v227, 2
        %vm309 = vcmp.eq.s32.totalorder %v306, %v305
        %vm310 = vcmp.eq.s32.totalorder %v307, %v305
        %vm311 = vcmp.eq.s32.totalorder %v308, %v305
        %312 = vst [vmem:[#allocation1] ss:$2 sm:$0xff] %v269
        %s313 = scalar_lea.vmem [#allocation1], 16
        %314 = vst [vmem:[%s313] ss:$2 sm:$0xff] %v271
        %v315 = vld.sshfl [vmem:[#allocation1] sm:$0xff pattern:$0x75316420]
        %v316 = vld.sshfl [vmem:[#allocation1 + $0x8] sm:$0xff pattern:$0x75316420]
        %v317 = vld.sshfl [vmem:[#allocation1 + $0x10] sm:$0xff pattern:$0x75316420]
        %v321 = vsel %vm309, %v315, 0.0
        %v322 = vsel %vm310, %v316, 0.0
        %v323 = vsel %vm311, %v317, 0.0
        %v324 = vsel %vm239, %v321, 0.0
        %v325 = vrot.slane %v324, 4
        %v326 = vadd.f32 %v324, %v325
        %v327 = vrot.slane %v326, 2
        %v328 = vadd.f32 %v326, %v327
        %v329 = vrot.slane %v328, 1
        %v330 = vadd.f32 %v328, %v329
        %v331 = vsel %vm239, %v322, 0.0
        %v332 = vrot.slane %v331, 4
        %v333 = vadd.f32 %v331, %v332
        %v334 = vrot.slane %v333, 2
        %v335 = vadd.f32 %v333, %v334
        %v336 = vrot.slane %v335, 1
        %v337 = vadd.f32 %v335, %v336
        %v338 = vsel %vm239, %v323, 0.0
        %v339 = vrot.slane %v338, 4
        %v340 = vadd.f32 %v338, %v339
        %v341 = vrot.slane %v340, 2
        %v342 = vadd.f32 %v340, %v341
        %v343 = vrot.slane %v342, 1
        %v344 = vadd.f32 %v342, %v343
        %v345 = vrcp.pop %v289
        %v346 = vmul.f32 %v289, %v345
        %v347 = vsub.f32 1.0, %v346
        %v348 = vmul.f32 %v345, %v347
        %v349 = vadd.f32 %v345, %v348
        %vm350 = vweird.f32 %v289
        %vm351 = vweird.f32 %v345
        %vm352 = vmor %vm350, %vm351
        %v353 = vsel %vm352, %v345, %v349
        %v354 = vand.u32 2147483647, %v289
        %vm355 = vcmp.eq.f32.partialorder %v354, 8.507059e+37
        %v356 = vand.u32 %v289, 2147483648
        %v357 = vor.u32 1.1754944e-38, %v356
        %v358 = vsel %vm355, %v357, %v353
        %v359 = vmul.f32 %v330, %v358
        %v360 = vrcp.pop %v296
        %v361 = vmul.f32 %v296, %v360
        %v362 = vsub.f32 1.0, %v361
        %v363 = vmul.f32 %v360, %v362
        %v364 = vadd.f32 %v360, %v363
        %vm365 = vweird.f32 %v296
        %vm366 = vweird.f32 %v360
        %vm367 = vmor %vm365, %vm366
        %v368 = vsel %vm367, %v360, %v364
        %v369 = vand.u32 2147483647, %v296
        %vm370 = vcmp.eq.f32.partialorder %v369, 8.507059e+37
        %v371 = vand.u32 %v296, 2147483648
        %v372 = vor.u32 1.1754944e-38, %v371
        %v373 = vsel %vm370, %v372, %v368
        %v374 = vmul.f32 %v337, %v373
        %v375 = vrcp.pop %v303
        %v376 = vmul.f32 %v303, %v375
        %v377 = vsub.f32 1.0, %v376
        %v378 = vmul.f32 %v375, %v377
        %v379 = vadd.f32 %v375, %v378
        %vm380 = vweird.f32 %v303
        %vm381 = vweird.f32 %v375
        %vm382 = vmor %vm380, %vm381
        %v383 = vsel %vm382, %v375, %v379
        %v384 = vand.u32 2147483647, %v303
        %vm385 = vcmp.eq.f32.partialorder %v384, 8.507059e+37
        %v386 = vand.u32 %v303, 2147483648
        %v387 = vor.u32 1.1754944e-38, %v386
        %v388 = vsel %vm385, %v387, %v383
        %v389 = vmul.f32 %v344, %v388
        %s390 = smul.u32 %s27, 384
        %v391 = vlaneseq
        %v392 = vand.u32 %v391, 127
        %v393 = vadd.s32 %v392, 128
        %v394 = vadd.s32 %v392, 256
        %v395 = vstv %s390
        %v396 = vadd.s32 %v395, %v392
        %v397 = vadd.s32 %v395, %v393
        %v398 = vadd.s32 %v395, %v394
        %vm399 = vcmp.lt.s32.totalorder %v396, 272
        %vm400 = vcmp.lt.s32.totalorder %v397, 272
        %vm401 = vcmp.lt.s32.totalorder %v398, 272
        %v402 = vsel %vm399, %v359, 0.0
        %v403 = vsel %vm400, %v374, 0.0
        %v404 = vsel %vm401, %v389, 0.0
        %vm405 = vcmask 1040384
        %v406 = vsel %vm405, %v402, 0.0
        %v407 = vsel %vm405, %v403, 0.0
        %v408 = vadd.f32 %v406, %v407
        %v409 = vsel %vm405, %v404, 0.0
        %v410 = vadd.f32 %v408, %v409
        %411 = vadd.xlane.f32.xlu0 %v410
        %v412 = vpop.xlane.xlu0 %411
        %v413 = vrot.slane %v412, 4
        %v414 = vadd.f32 %v412, %v413
        %v415 = vrot.slane %v414, 2
        %v416 = vadd.f32 %v414, %v415
        %v417 = vrot.slane %v416, 1
        %v418 = vadd.f32 %v416, %v417
        %s419 = vtos %v418
        %v420 = vstv %s419
        %421 = vst [vmem:[%s222] sm:$0xff] %v420
        %s422 = sand.u32 %s100, 1
        %s423 = scalar_lea.sflag [#allocation4], %s422
        %s424 = sand.u32 %s100, 1
        %s425 = smul.addr %s424, 8
        %s426 = scalar_lea.vmem [#allocation7], %s425
        // Predicated region
        $region37: #{tpu_custom_call.1} parent=27 // pred_check
          %p427 = pneg %p110
        $region38: #{tpu_custom_call.1} parent=27 // pred_check_branch
          %429 = sbr.rel (%p427) target = $region40
        $region39: #{tpu_custom_call.1} parent=27 // pred_region
          %431 = vsyncadd %s423, 0
          %s432 = sadd.s32 %s27, %s26
          %s433 = smul.addr %s432, 8
          %s434 = scalar_lea.hbm %s2, %s433
          %s436 = sshll.u32 %s426, 4
          %s437 = int_to_ptr.vmem [resolvable:$true] %s436
          %s438 = sshll.u32 %s434, 4
          %s439 = int_to_ptr.hbm [resolvable:$true] %s438
          %441 = dma.vmem_to_hbm [thread:$0]  %s437, 128, %s439, %s423
        $region40: #{tpu_custom_call.1} parent=27 // pred_fallthru
          _
      $region28: #{tpu_custom_call.1} parent=5 // pred_fallthru
        _
      %p442 = scmp.le.s32.totalorder 2, %s17
      // Predicated region
      $region41: #{tpu_custom_call.1} parent=5 // pred_check
        %p443 = pneg %p442
      $region42: #{tpu_custom_call.1} parent=5 // pred_check_branch
        %445 = sbr.rel (%p443) target = $region44
      $region43: #{tpu_custom_call.1} parent=5 // pred_region
        %s446 = ssub.s32 %s17, 2
        // Predicated region
        $region45: #{tpu_custom_call.1} parent=43 // pred_check
          %p447 = pneg %p116
        $region46: #{tpu_custom_call.1} parent=43 // pred_check_branch
          %449 = sbr.rel (%p447) target = $region48
        $region47: #{tpu_custom_call.1} parent=43 // pred_region
          %s450 = sand.u32 %s101, 1
          %s451 = scalar_lea.sflag [#allocation4], %s450
          %s452 = sand.u32 %s101, 1
          %s453 = smul.addr %s452, 8
          %s454 = scalar_lea.vmem [#allocation7], %s453
          %456 = dma.done %s451, 128
        $region48: #{tpu_custom_call.1} parent=43 // pred_fallthru
          _
      $region44: #{tpu_custom_call.1} parent=5 // pred_fallthru
        _
    $region6: #{tpu_custom_call.1} parent=1 // loop_footer
      %s21 = sadd.s32 1, %s17
    $region7: #{tpu_custom_call.1} parent=1 // loop_footer_branch
      %16 = sbr.rel target = $region3
    $region8: #{tpu_custom_call.1} parent=1 // loop_exit
      _
    %457 = vsyncpa [#allocation3], 1
    %s458 = scalar_lea.sflag [#allocation3], 1
    %459 = vsyncpa %s458, 1
    %460 = vsyncpa [#allocation6], 1
    %s461 = scalar_lea.sflag [#allocation6], 1
    %462 = vsyncpa %s461, 1
    %463 = vsyncpa [#allocation4], 1
    %s464 = scalar_lea.sflag [#allocation4], 1
    %465 = vsyncpa %s464, 1

</llo_original>
